<compile_context>
chip_gen: v5e
topology: v5e:2x2
jax: 0.10.0
libtpu: 0.0.40
codegen_flags: <defaults>
</compile_context>

<pallas_src>
import jax
import jax.numpy as jnp
import numpy as np
from jax.experimental import pallas as pl
from jax.experimental.pallas import tpu as pltpu


def conv_block_kernel(p_ref, w_ref, b_ref, o_ref):
    """One batch-block per grid step.

    p_ref: (B, 4, K*K*Cin, Hp*Wp)  im2col patches, one slab per 2x2 pool offset
    w_ref: (Cout, K*K*Cin)         conv weights, contraction on lanes-of-RHS rows
    b_ref: (Cout, 1)               conv bias (broadcast along lanes)
    o_ref: (B, Cout, Hp*Wp)        pooled output, NCHW-compatible lane-dense layout
    """
    w = w_ref[...]                     # (Cout, KKC) -- hoisted, reused for all matmuls
    b = b_ref[...]                     # (Cout, 1)
    B = o_ref.shape[0]

    for img in range(B):               # tiny static unroll (B is small)
        # Conv at pool offset q, for all pooled output positions at once (MXU).
        m = jnp.dot(w, p_ref[img, 0], preferred_element_type=jnp.float32)
        for q in range(1, 4):
            m = jnp.maximum(
                m, jnp.dot(w, p_ref[img, q], preferred_element_type=jnp.float32))
        # MaxPool2d(2) == max over the 4 offsets (done above, pure VPU maxima);
        # bias + ReLU commute with the max. Dropout(0.3): identity at inference.
        o_ref[img] = jnp.maximum(m + b, 0.0).astype(o_ref.dtype)


def _pick_batch_block(n):
    # >= 2 grid steps when possible (v7x megacore) while batching images per step
    # to amortize the ~0.35 us per-grid-step pipeline overhead.
    if n >= 2 and n % 2 == 0:
        return n // 2
    return 1


def conv_block(x_nchw, w_oihw, bias, padding):
    """Forward pass of ConvBlock. x_nchw: (N, Cin, H, W) -> (N, Cout, Hc//2, Wc//2)."""
    N, Cin, H, W = x_nchw.shape
    Cout, _, K, _ = w_oihw.shape

    Hpad, Wpad = H + 2 * padding, W + 2 * padding
    Hc, Wc = Hpad - K + 1, Wpad - K + 1            # conv output size (stride 1)
    Hp, Wp = Hc // 2, Wc // 2                      # pooled size (PyTorch floor)
    S = Hp * Wp
    KKC = Cin * K * K

    # ---- Wrapper glue: pad + im2col fused with the 2x2 pool-offset split --------
    x_pad = jnp.pad(x_nchw, ((0, 0), (0, 0), (padding, padding), (padding, padding)))
    Hp2, Wp2 = 2 * Hp, 2 * Wp
    q_slabs = []
    for dh in range(2):
        for dw in range(2):
            taps = []
            for kh in range(K):
                for kw in range(K):
                    taps.append(
                        x_pad[:, :,
                              dh + kh: dh + kh + Hp2: 2,
                              dw + kw: dw + kw + Wp2: 2])        # (N, Cin, Hp, Wp)
            t = jnp.stack(taps, axis=2)                          # (N, Cin, K*K, Hp, Wp)
            q_slabs.append(t.reshape(N, KKC, S))                 # kkc = c*K*K + kh*K + kw
    patches = jnp.stack(q_slabs, axis=1)                         # (N, 4, KKC, S)

    w_mat = w_oihw.reshape(Cout, KKC)                            # matches kkc ordering
    b2 = bias.reshape(Cout, 1)

    B = _pick_batch_block(N)
    grid = (N // B,)

    out = pl.pallas_call(
        conv_block_kernel,
        out_shape=jax.ShapeDtypeStruct((N, Cout, S), x_nchw.dtype),
        grid=grid,
        in_specs=[
            pl.BlockSpec((B, 4, KKC, S), lambda i: (i, 0, 0, 0)),
            pl.BlockSpec((Cout, KKC), lambda i: (0, 0)),
            pl.BlockSpec((Cout, 1), lambda i: (0, 0)),
        ],
        out_specs=pl.BlockSpec((B, Cout, S), lambda i: (i, 0, 0)),
        compiler_params=pltpu.CompilerParams(dimension_semantics=("parallel",)),
    )(patches, w_mat, b2)

    # Free contiguous reshape (no transpose): already NCHW-ordered.
    return out.reshape(N, Cout, Hp, Wp)


def reference(x_nchw, w_oihw, bias, padding):
    y = jax.lax.conv_general_dilated(
        x_nchw, w_oihw, window_strides=(1, 1),
        padding=[(padding, padding), (padding, padding)],
        dimension_numbers=("NCHW", "OIHW", "NCHW"))
    y = y + bias[None, :, None, None]
    y = jnp.maximum(y, 0.0)
    y = jax.lax.reduce_window(y, -jnp.inf, jax.lax.max,
                              window_dimensions=(1, 1, 2, 2),
                              window_strides=(1, 1, 2, 2), padding="VALID")
    return y


if __name__ == "__main__":
    # ConvBlock(in_channels=4, out_channels=8, kernel_size=3, padding=1)
    N, CIN, H, W = 2, 4, 16, 16
    COUT, K, PAD = 8, 3, 1

    key = jax.random.PRNGKey(0)
    kx, kw, kb = jax.random.split(key, 3)
    x = jax.random.normal(kx, (N, CIN, H, W), dtype=jnp.float32)
    fan_in = CIN * K * K
    w = jax.random.uniform(kw, (COUT, CIN, K, K), dtype=jnp.float32,
                           minval=-1.0, maxval=1.0) / np.sqrt(fan_in)
    b = jax.random.uniform(kb, (COUT,), dtype=jnp.float32,
                           minval=-1.0, maxval=1.0) / np.sqrt(fan_in)

    out = jax.block_until_ready(conv_block(x, w, b, PAD))
    ref = jax.block_until_ready(reference(x, w, b, PAD))

    np.testing.assert_allclose(np.asarray(out), np.asarray(ref), atol=1e-4, rtol=1e-4)
    assert out.shape == (N, COUT, H // 2, W // 2)

    print("KERNEL_OK")
</pallas_src>

<mosaic_0001>
module attributes {stable_mosaic.version = 11 : i64} {
  func.func @conv_block_kernel(%arg0: i32, %arg1: memref<1x4x36x64xf32, #tpu.memory_space<vmem>>, %arg2: memref<8x36xf32, #tpu.memory_space<vmem>>, %arg3: memref<8x1xf32, #tpu.memory_space<vmem>>, %arg4: memref<1x8x64xf32, #tpu.memory_space<vmem>>) attributes {dimension_semantics = [#tpu.dimension_semantics<parallel>], iteration_bounds = array<i64: 2>, scalar_prefetch = 0 : i64, scratch_operands = 0 : i64, tpu.core_type = #tpu.core_type<tc>, window_params = [{transform_indices = @transform_0, window_bounds = array<i64: 1, 4, 36, 64>}, {pipeline_mode = #tpu.pipeline_mode<synchronous>, transform_indices = @transform_1, window_bounds = array<i64: 8, 36>}, {pipeline_mode = #tpu.pipeline_mode<synchronous>, transform_indices = @transform_2, window_bounds = array<i64: 8, 1>}, {transform_indices = @transform_3, window_bounds = array<i64: 1, 8, 64>}]} {
    %c0 = arith.constant 0 : index
    %c0_0 = arith.constant 0 : index
    %0 = vector.load %arg2[%c0, %c0_0] : memref<8x36xf32, #tpu.memory_space<vmem>>, vector<8x36xf32>
    %c0_1 = arith.constant 0 : index
    %c0_2 = arith.constant 0 : index
    %1 = vector.load %arg3[%c0_1, %c0_2] : memref<8x1xf32, #tpu.memory_space<vmem>>, vector<8x1xf32>
    %c0_3 = arith.constant 0 : index
    %c0_4 = arith.constant 0 : index
    %c0_5 = arith.constant 0 : index
    %c0_6 = arith.constant 0 : index
    %2 = vector.load %arg1[%c0_3, %c0_4, %c0_5, %c0_6] : memref<1x4x36x64xf32, #tpu.memory_space<vmem>>, vector<1x1x36x64xf32>
    %3 = vector.shape_cast %2 : vector<1x1x36x64xf32> to vector<36x64xf32>
    %cst = arith.constant dense<0.000000e+00> : vector<8x64xf32>
    %4 = tpu.matmul %0, %3, %cst {dimension_numbers = #tpu.dot_dimension_numbers<[1], [0], [0], [1], [0, 0, 1, 1], [], []>} : vector<8x36xf32>, vector<36x64xf32>, vector<8x64xf32> -> vector<8x64xf32>
    %c0_7 = arith.constant 0 : index
    %c1 = arith.constant 1 : index
    %c0_8 = arith.constant 0 : index
    %c0_9 = arith.constant 0 : index
    %5 = vector.load %arg1[%c0_7, %c1, %c0_8, %c0_9] : memref<1x4x36x64xf32, #tpu.memory_space<vmem>>, vector<1x1x36x64xf32>
    %6 = vector.shape_cast %5 : vector<1x1x36x64xf32> to vector<36x64xf32>
    %cst_10 = arith.constant dense<0.000000e+00> : vector<8x64xf32>
    %7 = tpu.matmul %0, %6, %cst_10 {dimension_numbers = #tpu.dot_dimension_numbers<[1], [0], [0], [1], [0, 0, 1, 1], [], []>} : vector<8x36xf32>, vector<36x64xf32>, vector<8x64xf32> -> vector<8x64xf32>
    %8 = arith.maximumf %4, %7 : vector<8x64xf32>
    %c0_11 = arith.constant 0 : index
    %c2 = arith.constant 2 : index
    %c0_12 = arith.constant 0 : index
    %c0_13 = arith.constant 0 : index
    %9 = vector.load %arg1[%c0_11, %c2, %c0_12, %c0_13] : memref<1x4x36x64xf32, #tpu.memory_space<vmem>>, vector<1x1x36x64xf32>
    %10 = vector.shape_cast %9 : vector<1x1x36x64xf32> to vector<36x64xf32>
    %cst_14 = arith.constant dense<0.000000e+00> : vector<8x64xf32>
    %11 = tpu.matmul %0, %10, %cst_14 {dimension_numbers = #tpu.dot_dimension_numbers<[1], [0], [0], [1], [0, 0, 1, 1], [], []>} : vector<8x36xf32>, vector<36x64xf32>, vector<8x64xf32> -> vector<8x64xf32>
    %12 = arith.maximumf %8, %11 : vector<8x64xf32>
    %c0_15 = arith.constant 0 : index
    %c3 = arith.constant 3 : index
    %c0_16 = arith.constant 0 : index
    %c0_17 = arith.constant 0 : index
    %13 = vector.load %arg1[%c0_15, %c3, %c0_16, %c0_17] : memref<1x4x36x64xf32, #tpu.memory_space<vmem>>, vector<1x1x36x64xf32>
    %14 = vector.shape_cast %13 : vector<1x1x36x64xf32> to vector<36x64xf32>
    %cst_18 = arith.constant dense<0.000000e+00> : vector<8x64xf32>
    %15 = tpu.matmul %0, %14, %cst_18 {dimension_numbers = #tpu.dot_dimension_numbers<[1], [0], [0], [1], [0, 0, 1, 1], [], []>} : vector<8x36xf32>, vector<36x64xf32>, vector<8x64xf32> -> vector<8x64xf32>
    %16 = arith.maximumf %12, %15 : vector<8x64xf32>
    %17 = vector.broadcast %1 : vector<8x1xf32> to vector<8x64xf32>
    %18 = arith.addf %16, %17 : vector<8x64xf32>
    %cst_19 = arith.constant 0.000000e+00 : f32
    %19 = vector.broadcast %cst_19 : f32 to vector<8x64xf32>
    %20 = arith.maximumf %18, %19 : vector<8x64xf32>
    %c0_20 = arith.constant 0 : index
    %c0_21 = arith.constant 0 : index
    %c0_22 = arith.constant 0 : index
    %21 = vector.load %arg4[%c0_20, %c0_21, %c0_22] : memref<1x8x64xf32, #tpu.memory_space<vmem>>, vector<1x8x64xf32>
    %22 = vector.shape_cast %21 : vector<1x8x64xf32> to vector<8x64xf32>
    %23 = vector.shape_cast %20 : vector<8x64xf32> to vector<1x8x64xf32>
    tpu.vector_store %arg4[%c0_20, %c0_21, %c0_22], %23 {strides = array<i32>} : memref<1x8x64xf32, #tpu.memory_space<vmem>>, vector<1x8x64xf32>,
    return
  }
  func.func @transform_0(%arg0: i32) -> (i32, i32, i32, i32) {
    %c0_i32 = arith.constant 0 : i32
    %c0_i32_0 = arith.constant 0 : i32
    %c0_i32_1 = arith.constant 0 : i32
    %c0_i32_2 = arith.constant 0 : i32
    return %arg0, %c0_i32, %c0_i32_0, %c0_i32_1 : i32, i32, i32, i32
  }
  func.func @transform_1(%arg0: i32) -> (i32, i32) {
    %c0_i32 = arith.constant 0 : i32
    %c0_i32_0 = arith.constant 0 : i32
    %c0_i32_1 = arith.constant 0 : i32
    return %c0_i32, %c0_i32_0 : i32, i32
  }
  func.func @transform_2(%arg0: i32) -> (i32, i32) {
    %c0_i32 = arith.constant 0 : i32
    %c0_i32_0 = arith.constant 0 : i32
    %c0_i32_1 = arith.constant 0 : i32
    return %c0_i32, %c0_i32_0 : i32, i32
  }
  func.func @transform_3(%arg0: i32) -> (i32, i32, i32) {
    %c0_i32 = arith.constant 0 : i32
    %c0_i32_0 = arith.constant 0 : i32
    %c0_i32_1 = arith.constant 0 : i32
    return %arg0, %c0_i32, %c0_i32_0 : i32, i32, i32
  }
}

</mosaic_0001>

<llo_original>
// kernel: tpu_custom_call.1
$region0: #{tpu_custom_call.1}
  #allocation0 [shape = 'u32[]', space=smem, size = 0x4, offset = 0x4, fixed_abs, tag = 'smem constant byte address 0x4 - core index']
  #allocation1 [shape = 'u32[72,128]{1,0:T(1,128)}', space=vmem, size = 0x9000, scoped, tag = 'internal scratch']
  %s0 = inlined_call_operand.vmem [shape: f32[2,4,36,64], index: 0, kind: input, shape index: {}]
  %s1 = inlined_call_operand.vmem [shape: f32[8,36], index: 1, kind: input, shape index: {}]
  %s2 = inlined_call_operand.vmem [shape: f32[8,1], index: 2, kind: input, shape index: {}]
  %s3 = inlined_call_operand.hbm [shape: f32[2,8,64], index: 3, kind: output, shape index: {}]
  %s4 = sld [smem:[#allocation0]]
  $region45: #{tpu_custom_call.1} parent=0
    _
  %s6 = ssub.s32 1, %s4
  %s7 = scalar_select 0, %s6, %s4
  $region1: #{tpu_custom_call.1} parent=0
    #allocation2 [shape = 'u8[8192]{0}', space=vmem, size = 0x2000, scoped, tag = 'output window, operand 0']
    #allocation3 [shape = 's32[2]{0}', space=sflag, size = 0x8, scoped, tag = 'scoped memory for tpu_custom_call.1']
    %8 = vsyncpa [#allocation3], 0
    %s9 = scalar_lea.sflag [#allocation3], 1
    %10 = vsyncpa %s9, 0
    loop: start=0, step=1, limit=4
    $region2: #{tpu_custom_call.1} parent=1 // loop_pre_header
      _
    $region3: #{tpu_custom_call.1} parent=1 // loop_header
      %s12 = sphi 0, %s16
      %p13 = scmp.ge.s32.totalorder %s12, 4
      %s22 = sphi 0, %s24
      %s25 = sphi 0, %s22
      %s26 = sphi 0, %s25
      %s42 = sphi 0, %s26
      %s46 = sphi 0, %s46
      %s48 = sphi 0, %s46
      %s49 = sphi 0, %s48
      %s63 = sphi 0, %s49
      %s67 = sphi 0, %s67
      %s69 = sphi 0, %s67
      %s70 = sphi 0, %s69
      %s84 = sphi 0, %s70
      %s90 = sphi 0, %s92
      %s93 = sphi 0, %s90
      %s94 = sphi 0, %s93
      %s110 = sphi 0, %s94
    $region4: #{tpu_custom_call.1} parent=1 // loop_header_branch
      %15 = sbr.rel (%p13) target = $region8
    $region5: #{tpu_custom_call.1} parent=1 // loop_body
      %s17 = ssub.s32 %s12, 1
      %s18 = ssub.s32 %s12, 2
      %s19 = sadd.s32 %s12, 1
      %s20 = ssub.s32 %s12, %s19
      %p21 = scmp.eq.s32.totalorder %s20, 0
      %s23 = sadd.s32 %s22, 1
      %s24 = scalar_select %p21, %s22, %s23
      %p27 = pneg %p21
      %p28 = scmp.eq.s32.totalorder %s12, 1
      %p29 = por %p27, %p28
      %p30 = scmp.ne.s32.totalorder %s22, %s25
      %p31 = scmp.eq.s32.totalorder %s12, 0
      %p32 = por %p30, %p31
      %p33 = scmp.ne.s32.totalorder %s22, %s25
      %p34 = scmp.eq.s32.totalorder %s17, 1
      %p35 = por %p33, %p34
      %p36 = scmp.ne.s32.totalorder %s25, %s26
      %p37 = scmp.eq.s32.totalorder %s17, 0
      %p38 = por %p36, %p37
      %p39 = scmp.ne.s32.totalorder %s25, %s26
      %p40 = scmp.eq.s32.totalorder %s18, 1
      %p41 = por %p39, %p40
      %p43 = scmp.ne.s32.totalorder %s26, %s42
      %p44 = scmp.eq.s32.totalorder %s18, 0
      %p45 = por %p43, %p44
      %s47 = sadd.s32 %s46, 1
      %p50 = scmp.eq.s32.totalorder %s12, 1
      %p51 = scmp.ne.s32.totalorder %s46, %s48
      %p52 = scmp.eq.s32.totalorder %s12, 0
      %p53 = por %p51, %p52
      %p54 = scmp.ne.s32.totalorder %s46, %s48
      %p55 = scmp.eq.s32.totalorder %s17, 1
      %p56 = por %p54, %p55
      %p57 = scmp.ne.s32.totalorder %s48, %s49
      %p58 = scmp.eq.s32.totalorder %s17, 0
      %p59 = por %p57, %p58
      %p60 = scmp.ne.s32.totalorder %s48, %s49
      %p61 = scmp.eq.s32.totalorder %s18, 1
      %p62 = por %p60, %p61
      %p64 = scmp.ne.s32.totalorder %s49, %s63
      %p65 = scmp.eq.s32.totalorder %s18, 0
      %p66 = por %p64, %p65
      %s68 = sadd.s32 %s67, 1
      %p71 = scmp.eq.s32.totalorder %s12, 1
      %p72 = scmp.ne.s32.totalorder %s67, %s69
      %p73 = scmp.eq.s32.totalorder %s12, 0
      %p74 = por %p72, %p73
      %p75 = scmp.ne.s32.totalorder %s67, %s69
      %p76 = scmp.eq.s32.totalorder %s17, 1
      %p77 = por %p75, %p76
      %p78 = scmp.ne.s32.totalorder %s69, %s70
      %p79 = scmp.eq.s32.totalorder %s17, 0
      %p80 = por %p78, %p79
      %p81 = scmp.ne.s32.totalorder %s69, %s70
      %p82 = scmp.eq.s32.totalorder %s18, 1
      %p83 = por %p81, %p82
      %p85 = scmp.ne.s32.totalorder %s70, %s84
      %p86 = scmp.eq.s32.totalorder %s18, 0
      %p87 = por %p85, %p86
      %s88 = ssub.s32 %s12, %s19
      %p89 = scmp.eq.s32.totalorder %s88, 0
      %s91 = sadd.s32 %s90, 1
      %s92 = scalar_select %p89, %s90, %s91
      %p95 = pneg %p89
      %p96 = scmp.eq.s32.totalorder %s12, 1
      %p97 = por %p95, %p96
      %p98 = scmp.ne.s32.totalorder %s90, %s93
      %p99 = scmp.eq.s32.totalorder %s12, 0
      %p100 = por %p98, %p99
      %p101 = scmp.ne.s32.totalorder %s90, %s93
      %p102 = scmp.eq.s32.totalorder %s17, 1
      %p103 = por %p101, %p102
      %p104 = scmp.ne.s32.totalorder %s93, %s94
      %p105 = scmp.eq.s32.totalorder %s17, 0
      %p106 = por %p104, %p105
      %p107 = scmp.ne.s32.totalorder %s93, %s94
      %p108 = scmp.eq.s32.totalorder %s18, 1
      %p109 = por %p107, %p108
      %p111 = scmp.ne.s32.totalorder %s94, %s110
      %p112 = scmp.eq.s32.totalorder %s18, 0
      %p113 = por %p111, %p112
      %p114 = scmp.le.s32.totalorder 1, %s12
      %p115 = scmp.lt.s32.totalorder %s12, 3
      %p116 = pnand %p114, %p115
      %p117 = pneg %p116
      // Predicated region
      $region9: #{tpu_custom_call.1} parent=5 // pred_check
        _
      $region10: #{tpu_custom_call.1} parent=5 // pred_check_branch
        %119 = sbr.rel (%p116) target = $region12
      $region11: #{tpu_custom_call.1} parent=5 // pred_region
        %s120 = ssub.s32 %s12, 1
        // Predicated region
        $region13: #{tpu_custom_call.1} parent=11 // pred_check
          %p121 = pneg %p59
        $region14: #{tpu_custom_call.1} parent=11 // pred_check_branch
          %123 = sbr.rel (%p121) target = $region16
        $region15: #{tpu_custom_call.1} parent=11 // pred_region
          _
        $region16: #{tpu_custom_call.1} parent=11 // pred_fallthru
          _
        // Predicated region
        $region17: #{tpu_custom_call.1} parent=11 // pred_check
          %p124 = pneg %p80
        $region18: #{tpu_custom_call.1} parent=11 // pred_check_branch
          %126 = sbr.rel (%p124) target = $region20
        $region19: #{tpu_custom_call.1} parent=11 // pred_region
          _
        $region20: #{tpu_custom_call.1} parent=11 // pred_fallthru
          _
      $region12: #{tpu_custom_call.1} parent=5 // pred_fallthru
        _
      %p127 = scmp.lt.s32.totalorder %s12, 2
      // Predicated region
      $region21: #{tpu_custom_call.1} parent=5 // pred_check
        %p128 = pneg %p127
      $region22: #{tpu_custom_call.1} parent=5 // pred_check_branch
        %130 = sbr.rel (%p128) target = $region24
      $region23: #{tpu_custom_call.1} parent=5 // pred_region
        // Predicated region
        $region25: #{tpu_custom_call.1} parent=23 // pred_check
          %p131 = pneg %p32
        $region26: #{tpu_custom_call.1} parent=23 // pred_check_branch
          %133 = sbr.rel (%p131) target = $region28
        $region27: #{tpu_custom_call.1} parent=23 // pred_region
          %p134 = scmp.lt.s32.totalorder %s12, 1
          %s135 = scalar_select %p134, %s12, 1
          %s136 = smul.addr %s135, 20
          %s137 = smul.addr %s136, 8
          %s138 = scalar_lea.vmem %s0, %s137
        $region28: #{tpu_custom_call.1} parent=23 // pred_fallthru
          _
      $region24: #{tpu_custom_call.1} parent=5 // pred_fallthru
        _
      %p139 = scmp.le.s32.totalorder 1, %s12
      %p140 = scmp.lt.s32.totalorder %s12, 3
      %p141 = pnand %p139, %p140
      %p142 = pneg %p141
      // Predicated region
      $region29: #{tpu_custom_call.1} parent=5 // pred_check
        _
      $region30: #{tpu_custom_call.1} parent=5 // pred_check_branch
        %144 = sbr.rel (%p141) target = $region32
      $region31: #{tpu_custom_call.1} parent=5 // pred_region
        %s145 = ssub.s32 %s12, 1
        %p146 = scmp.lt.s32.totalorder %s17, 1
        %s147 = scalar_select %p146, %s17, 1
        %s148 = smul.addr %s147, 20
        %s149 = smul.addr %s148, 8
        %s150 = scalar_lea.vmem %s0, %s149
        %p151 = pneg %p38
        %p152 = pneg %p35
        %p153 = pneg %p59
        %p154 = pneg %p56
        %p155 = pneg %p80
        %p156 = pneg %p77
        %p157 = pneg %p106
        %p158 = pneg %p103
        %s159 = sand.u32 %s93, 1
        %s160 = scalar_lea.sflag [#allocation3], %s159
        %s161 = sand.u32 %s93, 1
        %s162 = smul.addr %s161, 8
        %s163 = scalar_lea.vmem [#allocation2], %s162
        %p164 = scmp.lt.s32.totalorder %s17, 1
        %s165 = scalar_select %p164, %s17, 1
        %s166 = smul.addr %s165, 20
        %s167 = smul.addr %s166, 8
        %s168 = scalar_lea.vmem %s0, %s167
        %v169 = vld [vmem:[%s1] sm:$0xff]
        %v170 = vld [vmem:[%s2] sm:$0xff]
        %v171 = vld [vmem:[%s168] sm:$0xff]
        %v172 = vld [vmem:[%s168 + $0x8] sm:$0xff]
        %v173 = vld [vmem:[%s168 + $0x10] sm:$0xff]
        %v174 = vld [vmem:[%s168 + $0x18] sm:$0xff]
        %v175 = vld [vmem:[%s168 + $0x20] sm:$0xf]
        %vm176 = vcmask 293888
        %v178 = vsel %vm176, %v169, 0
        %vm180 = vcmask 1043456
        %v182 = vsel %vm180, %v175, 0
        %184 = vmatpush.msra.mxu0 0.0
        %185 = vmatpush.msra.mxu0 0.0
        %186 = vmatpush.msra.mxu0 0.0
        %187 = vmatpush.msra.mxu0 0.0
        %188 = vmatpush.msra.mxu0 0.0
        %189 = vmatpush.msra.mxu0 0.0
        %190 = vmatpush.msra.mxu0 0.0
        %191 = vmatpush.msra.mxu0 0.0
        %192 = vmatpush.msra.mxu0 0.0
        %193 = vmatpush.msra.mxu0 0.0
        %194 = vmatpush.msra.mxu0 0.0
        %195 = vmatpush.msra.mxu0 %v182
        %196 = vmatpush.msra.mxu0 %v174
        %197 = vmatpush.msra.mxu0 %v173
        %198 = vmatpush.msra.mxu0 %v172
        %199 = vmatpush.msra.mxu0 %v171
        %200 = vmatmul.f32.gmra.mxu0 %v178
        %v201 = vpop.f32.mrf.mxu0
        %v202 = vadd.f32 0.0, %v201
        %203 = vdwg.mxu0
        %s204 = scalar_lea.vmem %s168, 40
        %v205 = vld [vmem:[%s204] sm:$0xff]
        %v206 = vld [vmem:[%s204 + $0x8] sm:$0xff]
        %v207 = vld [vmem:[%s204 + $0x10] sm:$0xff]
        %v208 = vld [vmem:[%s204 + $0x18] sm:$0xff]
        %v209 = vld [vmem:[%s204 + $0x20] sm:$0xf]
        %v211 = vsel %vm180, %v209, 0
        %213 = vmatpush.msra.mxu0 0.0
        %214 = vmatpush.msra.mxu0 0.0
        %215 = vmatpush.msra.mxu0 0.0
        %216 = vmatpush.msra.mxu0 0.0
        %217 = vmatpush.msra.mxu0 0.0
        %218 = vmatpush.msra.mxu0 0.0
        %219 = vmatpush.msra.mxu0 0.0
        %220 = vmatpush.msra.mxu0 0.0
        %221 = vmatpush.msra.mxu0 0.0
        %222 = vmatpush.msra.mxu0 0.0
        %223 = vmatpush.msra.mxu0 0.0
        %224 = vmatpush.msra.mxu0 %v211
        %225 = vmatpush.msra.mxu0 %v208
        %226 = vmatpush.msra.mxu0 %v207
        %227 = vmatpush.msra.mxu0 %v206
        %228 = vmatpush.msra.mxu0 %v205
        %229 = vmatmul.f32.gmra.mxu0 %v178
        %v230 = vpop.f32.mrf.mxu0
        %v231 = vadd.f32 0.0, %v230
        %232 = vdwg.mxu0
        %v233 = vmax.f32 %v202, %v231
        %s234 = scalar_lea.vmem %s168, 80
        %v235 = vld [vmem:[%s234] sm:$0xff]
        %v236 = vld [vmem:[%s234 + $0x8] sm:$0xff]
        %v237 = vld [vmem:[%s234 + $0x10] sm:$0xff]
        %v238 = vld [vmem:[%s234 + $0x18] sm:$0xff]
        %v239 = vld [vmem:[%s234 + $0x20] sm:$0xf]
        %v241 = vsel %vm180, %v239, 0
        %243 = vmatpush.msra.mxu0 0.0
        %244 = vmatpush.msra.mxu0 0.0
        %245 = vmatpush.msra.mxu0 0.0
        %246 = vmatpush.msra.mxu0 0.0
        %247 = vmatpush.msra.mxu0 0.0
        %248 = vmatpush.msra.mxu0 0.0
        %249 = vmatpush.msra.mxu0 0.0
        %250 = vmatpush.msra.mxu0 0.0
        %251 = vmatpush.msra.mxu0 0.0
        %252 = vmatpush.msra.mxu0 0.0
        %253 = vmatpush.msra.mxu0 0.0
        %254 = vmatpush.msra.mxu0 %v241
        %255 = vmatpush.msra.mxu0 %v238
        %256 = vmatpush.msra.mxu0 %v237
        %257 = vmatpush.msra.mxu0 %v236
        %258 = vmatpush.msra.mxu0 %v235
        %259 = vmatmul.f32.gmra.mxu0 %v178
        %v260 = vpop.f32.mrf.mxu0
        %v261 = vadd.f32 0.0, %v260
        %262 = vdwg.mxu0
        %v263 = vmax.f32 %v233, %v261
        %s264 = scalar_lea.vmem %s168, 120
        %v265 = vld [vmem:[%s264] sm:$0xff]
        %v266 = vld [vmem:[%s264 + $0x8] sm:$0xff]
        %v267 = vld [vmem:[%s264 + $0x10] sm:$0xff]
        %v268 = vld [vmem:[%s264 + $0x18] sm:$0xff]
        %v269 = vld [vmem:[%s264 + $0x20] sm:$0xf]
        %v271 = vsel %vm180, %v269, 0
        %273 = vmatpush.msra.mxu0 0.0
        %274 = vmatpush.msra.mxu0 0.0
        %275 = vmatpush.msra.mxu0 0.0
        %276 = vmatpush.msra.mxu0 0.0
        %277 = vmatpush.msra.mxu0 0.0
        %278 = vmatpush.msra.mxu0 0.0
        %279 = vmatpush.msra.mxu0 0.0
        %280 = vmatpush.msra.mxu0 0.0
        %281 = vmatpush.msra.mxu0 0.0
        %282 = vmatpush.msra.mxu0 0.0
        %283 = vmatpush.msra.mxu0 0.0
        %284 = vmatpush.msra.mxu0 %v271
        %285 = vmatpush.msra.mxu0 %v268
        %286 = vmatpush.msra.mxu0 %v267
        %287 = vmatpush.msra.mxu0 %v266
        %288 = vmatpush.msra.mxu0 %v265
        %289 = vmatmul.f32.gmra.mxu0 %v178
        %v290 = vpop.f32.mrf.mxu0
        %v291 = vadd.f32 0.0, %v290
        %292 = vdwg.mxu0
        %v293 = vmax.f32 %v263, %v291
        %295 = vset.pattern.permute.xlu0 0
        %296 = vperm.xlu0 %295, %v170
        %v297 = vpop.permute.xlu0 %296
        %v299 = vadd.f32 %v293, %v297
        %v300 = vmax.f32 %v299, 0.0
        %vm301 = vcmask 523264
        %302 = vst.msk [vmem:[%s163] sm:$0xff] %vm301, %v300
        %s303 = sand.u32 %s93, 1
        %s304 = scalar_lea.sflag [#allocation3], %s303
        %s305 = sand.u32 %s93, 1
        %s306 = smul.addr %s305, 8
        %s307 = scalar_lea.vmem [#allocation2], %s306
        // Predicated region
        $region33: #{tpu_custom_call.1} parent=31 // pred_check
          %p308 = pneg %p103
        $region34: #{tpu_custom_call.1} parent=31 // pred_check_branch
          %310 = sbr.rel (%p308) target = $region36
        $region35: #{tpu_custom_call.1} parent=31 // pred_region
          %312 = vsyncadd %s304, 0
          %s313 = smul.addr %s17, 8
          %s314 = scalar_lea.hbm %s3, %s313
          %s316 = sshll.u32 %s307, 4
          %s317 = int_to_ptr.vmem [resolvable:$true] %s316
          %s318 = sshll.u32 %s314, 4
          %s319 = int_to_ptr.hbm [resolvable:$true] %s318
          %321 = dma.vmem_to_hbm [thread:$0]  %s317, 128, %s319, %s304
        $region36: #{tpu_custom_call.1} parent=31 // pred_fallthru
          _
      $region32: #{tpu_custom_call.1} parent=5 // pred_fallthru
        _
      %p322 = scmp.le.s32.totalorder 2, %s12
      // Predicated region
      $region37: #{tpu_custom_call.1} parent=5 // pred_check
        %p323 = pneg %p322
      $region38: #{tpu_custom_call.1} parent=5 // pred_check_branch
        %325 = sbr.rel (%p323) target = $region40
      $region39: #{tpu_custom_call.1} parent=5 // pred_region
        %s326 = ssub.s32 %s12, 2
        // Predicated region
        $region41: #{tpu_custom_call.1} parent=39 // pred_check
          %p327 = pneg %p109
        $region42: #{tpu_custom_call.1} parent=39 // pred_check_branch
          %329 = sbr.rel (%p327) target = $region44
        $region43: #{tpu_custom_call.1} parent=39 // pred_region
          %s330 = sand.u32 %s94, 1
          %s331 = scalar_lea.sflag [#allocation3], %s330
          %s332 = sand.u32 %s94, 1
          %s333 = smul.addr %s332, 8
          %s334 = scalar_lea.vmem [#allocation2], %s333
          %336 = dma.done %s331, 128
        $region44: #{tpu_custom_call.1} parent=39 // pred_fallthru
          _
      $region40: #{tpu_custom_call.1} parent=5 // pred_fallthru
        _
    $region6: #{tpu_custom_call.1} parent=1 // loop_footer
      %s16 = sadd.s32 1, %s12
    $region7: #{tpu_custom_call.1} parent=1 // loop_footer_branch
      %11 = sbr.rel target = $region3
    $region8: #{tpu_custom_call.1} parent=1 // loop_exit
      _
    %337 = vsyncpa [#allocation3], 1
    %s338 = scalar_lea.sflag [#allocation3], 1
    %339 = vsyncpa %s338, 1

</llo_original>
